<compile_context>
chip_gen: v5e
topology: v5e:2x2
jax: 0.10.0
libtpu: 0.0.40
codegen_flags: <defaults>
</compile_context>

<pallas_src>
import jax
import jax.numpy as jnp
from jax import lax
from jax.experimental import pallas as pl
from jax.experimental.pallas import tpu as pltpu


# ---- static model dims (n_embeds=1, lstm, unidirectional, out_layer=True) ----
DIN = 16        # n_input
H = 32          # n_hidden
SPANS = 2
L = 5           # n_labels
T = 8           # max sequence length
LANES = 128     # 4*H == T*DIN == 128 : one full vreg width

# packed-parameter row offsets (8-aligned sections)
_WIH_OFF = 0                        # (DIN, 4H)          rows   0:16
_WHH_OFF = _WIH_OFF + DIN           # (H, 4H)            rows  16:48
_B_OFF = _WHH_OFF + H               # bias bcast x8      rows  48:56
_WFC_OFF = _B_OFF + 8               # (SPANS*H, L pad)   rows  56:120
_BFC_OFF = _WFC_OFF + SPANS * H     # fc bias bcast x8   rows 120:128
_P_ROWS = _BFC_OFF + 8              # 128


def probe_kernel(x_ref, sz_ref, p_ref, out_ref):
    """Single invocation (no grid): folded span*batch LSTM recurrence + FC head.

    x_ref  : (S*B, T*DIN) f32  row sb = b*SPANS + s, lane = t*DIN + d
    sz_ref : (S*B, 1)     i32  span sizes, same row order
    p_ref  : (_P_ROWS, 128) f32 packed params (g-gate columns pre-scaled by 2)
    out_ref: (B, L)       f32  logits
    """
    SB = x_ref.shape[0]
    B, Lout = out_ref.shape
    S = SB // B

    wih = p_ref[_WIH_OFF:_WIH_OFF + DIN, :]       # (16, 128)
    whh = p_ref[_WHH_OFF:_WHH_OFF + H, :]         # (32, 128)
    b = p_ref[_B_OFF:_B_OFF + SB, :]              # (SB, 128) bias replicated per row
    x = x_ref[...]                                # (SB, 128)
    sz = jnp.clip(sz_ref[...], 1, T)              # (SB, 1)

    h = jnp.zeros((SB, H), jnp.float32)
    c = jnp.zeros((SB, H), jnp.float32)
    h_sel = jnp.zeros((SB, H), jnp.float32)

    # Statically unrolled recurrence (T small & static).
    for t in range(T):
        # Off the serial chain: per-step input projection from a static lane slice.
        gx_t = jnp.dot(x[:, t * DIN:(t + 1) * DIN], wih,
                       preferred_element_type=jnp.float32) + b        # (SB, 4H)
        # On the serial chain: recurrence matmul + single full-width sigmoid.
        gates = gx_t + jnp.dot(h, whh, preferred_element_type=jnp.float32)
        sig = jax.nn.sigmoid(gates)               # one EUP pass over (SB, 128)
        i = sig[:, 0 * H:1 * H]
        f = sig[:, 1 * H:2 * H]
        g = 2.0 * sig[:, 2 * H:3 * H] - 1.0       # tanh(pre_g): g-cols pre-scaled x2
        o = sig[:, 3 * H:4 * H]
        c = f * c + i * g
        h = o * jnp.tanh(c)
        # select h at t == size - 1 (exactly one t matches per row)
        h_sel = jnp.where(sz == (t + 1), h, h_sel)

    # FC head: out[b] = bfc + sum_s h_sel[b*S + s] @ Wfc_s
    # Rows are (b, s)-interleaved; compress with tiny matmul row-gathers
    # (all off the critical path; weights padded to 128 lanes with zeros).
    bfc = p_ref[_BFC_OFF:_BFC_OFF + B, :]          # (B, 128)
    b_idx = lax.broadcasted_iota(jnp.int32, (B, SB), 0)
    j_idx = lax.broadcasted_iota(jnp.int32, (B, SB), 1)
    acc = bfc
    for s in range(S):
        wfc_s = p_ref[_WFC_OFF + s * H:_WFC_OFF + (s + 1) * H, :]      # (H, 128)
        p_s = jnp.dot(h_sel, wfc_s, preferred_element_type=jnp.float32)  # (SB, 128)
        r_s = (j_idx == b_idx * S + s).astype(jnp.float32)             # (B, SB)
        acc = acc + jnp.dot(r_s, p_s, preferred_element_type=jnp.float32)
    out_ref[...] = acc[:, :Lout]


def pack_params(w_ih, w_hh, b_ih, b_hh, w_fc, b_fc):
    """Pack PyTorch-shaped LSTM/Linear params into one (128,128) buffer.

    Pre-scales the g-gate columns by 2 so the kernel can use the exact identity
    tanh(x) = 2*sigmoid(2x) - 1 with a single full-width sigmoid per step.
    PyTorch gate order: i, f, g, o.
    """
    wih_t = w_ih.T                                  # (DIN, 4H)
    whh_t = w_hh.T                                  # (H, 4H)
    bsum = b_ih + b_hh                              # (4H,)
    gate_scale = jnp.concatenate(
        [jnp.ones(2 * H, jnp.float32), 2.0 * jnp.ones(H, jnp.float32),
         jnp.ones(H, jnp.float32)])
    wih_t = wih_t * gate_scale[None, :]
    whh_t = whh_t * gate_scale[None, :]
    bsum = bsum * gate_scale

    p = jnp.zeros((_P_ROWS, LANES), jnp.float32)
    p = p.at[_WIH_OFF:_WIH_OFF + DIN, :].set(wih_t)
    p = p.at[_WHH_OFF:_WHH_OFF + H, :].set(whh_t)
    p = p.at[_B_OFF:_B_OFF + 8, :].set(jnp.broadcast_to(bsum[None, :], (8, LANES)))
    p = p.at[_WFC_OFF:_WFC_OFF + SPANS * H, :L].set(w_fc.T)   # span-major rows
    p = p.at[_BFC_OFF:_BFC_OFF + 8, :L].set(jnp.broadcast_to(b_fc[None, :], (8, L)))
    return p


@jax.jit
def probe_forward(embed, span_sizes, packed_params):
    """embed: (B, SPANS, T, DIN) f32; span_sizes: (B, SPANS) i32 in [1, T]."""
    B = embed.shape[0]
    SB = B * SPANS
    # Pure reshapes only — no transpose HLO, no extra HBM round trip.
    x = embed.reshape(SB, T * DIN)
    sz = span_sizes.reshape(SB, 1).astype(jnp.int32)
    return pl.pallas_call(
        probe_kernel,
        out_shape=jax.ShapeDtypeStruct((B, L), jnp.float32),
        in_specs=[pl.BlockSpec(memory_space=pltpu.MemorySpace.VMEM)] * 3,
        out_specs=pl.BlockSpec(memory_space=pltpu.MemorySpace.VMEM),
    )(x, sz, packed_params)
    # NOTE: no grid (single invocation); when batched across many examples /
    # probes, add a "parallel" grid axis so v7x can shard across its 2 TCs.


def ref_forward(embed, span_sizes, raw_params):
    """Pure-JAX reference with the original (unscaled) parameters."""
    w_ih, w_hh, b_ih, b_hh, w_fc, b_fc = raw_params
    B, S, T_, _ = embed.shape
    H_ = w_hh.shape[1]
    wih_t, whh_t, b2 = w_ih.T, w_hh.T, (b_ih + b_hh)[None, :]
    outs = []
    for s in range(S):
        xs = embed[:, s]                              # (B, T, Din)
        h = jnp.zeros((B, H_), jnp.float32)
        c = jnp.zeros((B, H_), jnp.float32)
        hs = []
        for t in range(T_):
            gates = xs[:, t] @ wih_t + h @ whh_t + b2
            i = jax.nn.sigmoid(gates[:, 0 * H_:1 * H_])
            f = jax.nn.sigmoid(gates[:, 1 * H_:2 * H_])
            g = jnp.tanh(gates[:, 2 * H_:3 * H_])
            o = jax.nn.sigmoid(gates[:, 3 * H_:4 * H_])
            c = f * c + i * g
            h = o * jnp.tanh(c)
            hs.append(h)
        hs = jnp.stack(hs, axis=1)                    # (B, T, H)
        outs.append(hs[jnp.arange(B), span_sizes[:, s] - 1])
    cat = jnp.concatenate(outs, axis=1)               # (B, S*H)
    return cat @ w_fc.T + b_fc[None, :]


if __name__ == "__main__":
    B = 4
    key = jax.random.PRNGKey(0)
    k_emb, k_sz, k_wih, k_whh, k_bih, k_bhh, k_wfc, k_bfc = jax.random.split(key, 8)

    embed = jax.random.normal(k_emb, (B, SPANS, T, DIN), jnp.float32)
    span_sizes = jax.random.randint(k_sz, (B, SPANS), 1, T + 1).astype(jnp.int32)

    # deterministic synthetic parameters (PyTorch shapes)
    w_ih = 0.1 * jax.random.normal(k_wih, (4 * H, DIN), jnp.float32)
    w_hh = 0.1 * jax.random.normal(k_whh, (4 * H, H), jnp.float32)
    b_ih = 0.1 * jax.random.normal(k_bih, (4 * H,), jnp.float32)
    b_hh = 0.1 * jax.random.normal(k_bhh, (4 * H,), jnp.float32)
    w_fc = 0.1 * jax.random.normal(k_wfc, (L, SPANS * H), jnp.float32)
    b_fc = 0.1 * jax.random.normal(k_bfc, (L,), jnp.float32)

    packed = pack_params(w_ih, w_hh, b_ih, b_hh, w_fc, b_fc)

    # in_dropout / hidden_dropout are identity in eval mode.
    out = probe_forward(embed, span_sizes, packed)
    out = jax.block_until_ready(out)

    ref = ref_forward(embed, span_sizes, (w_ih, w_hh, b_ih, b_hh, w_fc, b_fc))
    assert out.shape == (B, L)
    assert jnp.allclose(out, ref, rtol=1e-4, atol=1e-4), (out, ref)

    print("KERNEL_OK")
</pallas_src>

<mosaic_0001>
module attributes {stable_mosaic.version = 11 : i64} {
  func.func @probe_kernel(%arg0: memref<8x128xf32, #tpu.memory_space<vmem>>, %arg1: memref<8x1xi32, #tpu.memory_space<vmem>>, %arg2: memref<128x128xf32, #tpu.memory_space<vmem>>, %arg3: memref<4x5xf32, #tpu.memory_space<vmem>>) attributes {dimension_semantics = [], scalar_prefetch = 0 : i64, scratch_operands = 0 : i64, tpu.core_type = #tpu.core_type<tc>} {
    %c0 = arith.constant 0 : index
    %c0_0 = arith.constant 0 : index
    %0 = vector.load %arg2[%c0, %c0_0] : memref<128x128xf32, #tpu.memory_space<vmem>>, vector<16x128xf32>
    %c16 = arith.constant 16 : index
    %c0_1 = arith.constant 0 : index
    %1 = vector.load %arg2[%c16, %c0_1] : memref<128x128xf32, #tpu.memory_space<vmem>>, vector<32x128xf32>
    %c48 = arith.constant 48 : index
    %c0_2 = arith.constant 0 : index
    %2 = vector.load %arg2[%c48, %c0_2] : memref<128x128xf32, #tpu.memory_space<vmem>>, vector<8x128xf32>
    %c0_3 = arith.constant 0 : index
    %c0_4 = arith.constant 0 : index
    %3 = vector.load %arg0[%c0_3, %c0_4] : memref<8x128xf32, #tpu.memory_space<vmem>>, vector<8x128xf32>
    %c0_5 = arith.constant 0 : index
    %c0_6 = arith.constant 0 : index
    %4 = vector.load %arg1[%c0_5, %c0_6] : memref<8x1xi32, #tpu.memory_space<vmem>>, vector<8x1xi32>
    %c1_i32 = arith.constant 1 : i32
    %c8_i32 = arith.constant 8 : i32
    %5 = vector.broadcast %c1_i32 : i32 to vector<8x1xi32>
    %6 = arith.maxsi %5, %4 : vector<8x1xi32>
    %7 = vector.broadcast %c8_i32 : i32 to vector<8x1xi32>
    %8 = arith.minsi %7, %6 : vector<8x1xi32>
    %cst = arith.constant 0.000000e+00 : f32
    %9 = vector.broadcast %cst : f32 to vector<8x32xf32>
    %cst_7 = arith.constant 0.000000e+00 : f32
    %10 = vector.broadcast %cst_7 : f32 to vector<8x32xf32>
    %cst_8 = arith.constant 0.000000e+00 : f32
    %11 = vector.broadcast %cst_8 : f32 to vector<8x32xf32>
    %12 = vector.extract_strided_slice %3 {offsets = [0, 0], sizes = [8, 16], strides = [1, 1]} : vector<8x128xf32> to vector<8x16xf32>
    %cst_9 = arith.constant dense<0.000000e+00> : vector<8x128xf32>
    %13 = tpu.matmul %12, %0, %cst_9 {dimension_numbers = #tpu.dot_dimension_numbers<[1], [0], [0], [1], [0, 0, 1, 1], [], []>} : vector<8x16xf32>, vector<16x128xf32>, vector<8x128xf32> -> vector<8x128xf32>
    %14 = arith.addf %13, %2 : vector<8x128xf32>
    %cst_10 = arith.constant dense<0.000000e+00> : vector<8x128xf32>
    %15 = tpu.matmul %9, %1, %cst_10 {dimension_numbers = #tpu.dot_dimension_numbers<[1], [0], [0], [1], [0, 0, 1, 1], [], []>} : vector<8x32xf32>, vector<32x128xf32>, vector<8x128xf32> -> vector<8x128xf32>
    %16 = arith.addf %14, %15 : vector<8x128xf32>
    %17 = arith.negf %16 : vector<8x128xf32>
    %18 = math.exp %17 : vector<8x128xf32>
    %cst_11 = arith.constant 1.000000e+00 : f32
    %19 = vector.broadcast %cst_11 : f32 to vector<8x128xf32>
    %20 = arith.addf %19, %18 : vector<8x128xf32>
    %21 = arith.divf %19, %20 : vector<8x128xf32>
    %22 = vector.extract_strided_slice %21 {offsets = [0, 0], sizes = [8, 32], strides = [1, 1]} : vector<8x128xf32> to vector<8x32xf32>
    %23 = vector.extract_strided_slice %21 {offsets = [0, 32], sizes = [8, 32], strides = [1, 1]} : vector<8x128xf32> to vector<8x32xf32>
    %24 = vector.extract_strided_slice %21 {offsets = [0, 64], sizes = [8, 32], strides = [1, 1]} : vector<8x128xf32> to vector<8x32xf32>
    %cst_12 = arith.constant 2.000000e+00 : f32
    %25 = vector.broadcast %cst_12 : f32 to vector<8x32xf32>
    %26 = arith.mulf %25, %24 : vector<8x32xf32>
    %cst_13 = arith.constant 1.000000e+00 : f32
    %27 = vector.broadcast %cst_13 : f32 to vector<8x32xf32>
    %28 = arith.subf %26, %27 : vector<8x32xf32>
    %29 = vector.extract_strided_slice %21 {offsets = [0, 96], sizes = [8, 32], strides = [1, 1]} : vector<8x128xf32> to vector<8x32xf32>
    %30 = arith.mulf %23, %10 : vector<8x32xf32>
    %31 = arith.mulf %22, %28 : vector<8x32xf32>
    %32 = arith.addf %30, %31 : vector<8x32xf32>
    %33 = math.tanh %32 : vector<8x32xf32>
    %34 = arith.mulf %29, %33 : vector<8x32xf32>
    %c1_i32_14 = arith.constant 1 : i32
    %35 = vector.broadcast %c1_i32_14 : i32 to vector<8x1xi32>
    %36 = arith.cmpi eq, %8, %35 : vector<8x1xi32>
    %37 = vector.shape_cast %36 : vector<8x1xi1> to vector<8x1xi1>
    %38 = vector.broadcast %37 : vector<8x1xi1> to vector<8x32xi1>
    %39 = arith.select %38, %34, %11 : vector<8x32xi1>, vector<8x32xf32>
    %40 = vector.extract_strided_slice %3 {offsets = [0, 16], sizes = [8, 16], strides = [1, 1]} : vector<8x128xf32> to vector<8x16xf32>
    %cst_15 = arith.constant dense<0.000000e+00> : vector<8x128xf32>
    %41 = tpu.matmul %40, %0, %cst_15 {dimension_numbers = #tpu.dot_dimension_numbers<[1], [0], [0], [1], [0, 0, 1, 1], [], []>} : vector<8x16xf32>, vector<16x128xf32>, vector<8x128xf32> -> vector<8x128xf32>
    %42 = arith.addf %41, %2 : vector<8x128xf32>
    %cst_16 = arith.constant dense<0.000000e+00> : vector<8x128xf32>
    %43 = tpu.matmul %34, %1, %cst_16 {dimension_numbers = #tpu.dot_dimension_numbers<[1], [0], [0], [1], [0, 0, 1, 1], [], []>} : vector<8x32xf32>, vector<32x128xf32>, vector<8x128xf32> -> vector<8x128xf32>
    %44 = arith.addf %42, %43 : vector<8x128xf32>
    %45 = arith.negf %44 : vector<8x128xf32>
    %46 = math.exp %45 : vector<8x128xf32>
    %cst_17 = arith.constant 1.000000e+00 : f32
    %47 = vector.broadcast %cst_17 : f32 to vector<8x128xf32>
    %48 = arith.addf %47, %46 : vector<8x128xf32>
    %49 = arith.divf %47, %48 : vector<8x128xf32>
    %50 = vector.extract_strided_slice %49 {offsets = [0, 0], sizes = [8, 32], strides = [1, 1]} : vector<8x128xf32> to vector<8x32xf32>
    %51 = vector.extract_strided_slice %49 {offsets = [0, 32], sizes = [8, 32], strides = [1, 1]} : vector<8x128xf32> to vector<8x32xf32>
    %52 = vector.extract_strided_slice %49 {offsets = [0, 64], sizes = [8, 32], strides = [1, 1]} : vector<8x128xf32> to vector<8x32xf32>
    %cst_18 = arith.constant 2.000000e+00 : f32
    %53 = vector.broadcast %cst_18 : f32 to vector<8x32xf32>
    %54 = arith.mulf %53, %52 : vector<8x32xf32>
    %cst_19 = arith.constant 1.000000e+00 : f32
    %55 = vector.broadcast %cst_19 : f32 to vector<8x32xf32>
    %56 = arith.subf %54, %55 : vector<8x32xf32>
    %57 = vector.extract_strided_slice %49 {offsets = [0, 96], sizes = [8, 32], strides = [1, 1]} : vector<8x128xf32> to vector<8x32xf32>
    %58 = arith.mulf %51, %32 : vector<8x32xf32>
    %59 = arith.mulf %50, %56 : vector<8x32xf32>
    %60 = arith.addf %58, %59 : vector<8x32xf32>
    %61 = math.tanh %60 : vector<8x32xf32>
    %62 = arith.mulf %57, %61 : vector<8x32xf32>
    %c2_i32 = arith.constant 2 : i32
    %63 = vector.broadcast %c2_i32 : i32 to vector<8x1xi32>
    %64 = arith.cmpi eq, %8, %63 : vector<8x1xi32>
    %65 = vector.shape_cast %64 : vector<8x1xi1> to vector<8x1xi1>
    %66 = vector.broadcast %65 : vector<8x1xi1> to vector<8x32xi1>
    %67 = arith.select %66, %62, %39 : vector<8x32xi1>, vector<8x32xf32>
    %68 = vector.extract_strided_slice %3 {offsets = [0, 32], sizes = [8, 16], strides = [1, 1]} : vector<8x128xf32> to vector<8x16xf32>
    %cst_20 = arith.constant dense<0.000000e+00> : vector<8x128xf32>
    %69 = tpu.matmul %68, %0, %cst_20 {dimension_numbers = #tpu.dot_dimension_numbers<[1], [0], [0], [1], [0, 0, 1, 1], [], []>} : vector<8x16xf32>, vector<16x128xf32>, vector<8x128xf32> -> vector<8x128xf32>
    %70 = arith.addf %69, %2 : vector<8x128xf32>
    %cst_21 = arith.constant dense<0.000000e+00> : vector<8x128xf32>
    %71 = tpu.matmul %62, %1, %cst_21 {dimension_numbers = #tpu.dot_dimension_numbers<[1], [0], [0], [1], [0, 0, 1, 1], [], []>} : vector<8x32xf32>, vector<32x128xf32>, vector<8x128xf32> -> vector<8x128xf32>
    %72 = arith.addf %70, %71 : vector<8x128xf32>
    %73 = arith.negf %72 : vector<8x128xf32>
    %74 = math.exp %73 : vector<8x128xf32>
    %cst_22 = arith.constant 1.000000e+00 : f32
    %75 = vector.broadcast %cst_22 : f32 to vector<8x128xf32>
    %76 = arith.addf %75, %74 : vector<8x128xf32>
    %77 = arith.divf %75, %76 : vector<8x128xf32>
    %78 = vector.extract_strided_slice %77 {offsets = [0, 0], sizes = [8, 32], strides = [1, 1]} : vector<8x128xf32> to vector<8x32xf32>
    %79 = vector.extract_strided_slice %77 {offsets = [0, 32], sizes = [8, 32], strides = [1, 1]} : vector<8x128xf32> to vector<8x32xf32>
    %80 = vector.extract_strided_slice %77 {offsets = [0, 64], sizes = [8, 32], strides = [1, 1]} : vector<8x128xf32> to vector<8x32xf32>
    %cst_23 = arith.constant 2.000000e+00 : f32
    %81 = vector.broadcast %cst_23 : f32 to vector<8x32xf32>
    %82 = arith.mulf %81, %80 : vector<8x32xf32>
    %cst_24 = arith.constant 1.000000e+00 : f32
    %83 = vector.broadcast %cst_24 : f32 to vector<8x32xf32>
    %84 = arith.subf %82, %83 : vector<8x32xf32>
    %85 = vector.extract_strided_slice %77 {offsets = [0, 96], sizes = [8, 32], strides = [1, 1]} : vector<8x128xf32> to vector<8x32xf32>
    %86 = arith.mulf %79, %60 : vector<8x32xf32>
    %87 = arith.mulf %78, %84 : vector<8x32xf32>
    %88 = arith.addf %86, %87 : vector<8x32xf32>
    %89 = math.tanh %88 : vector<8x32xf32>
    %90 = arith.mulf %85, %89 : vector<8x32xf32>
    %c3_i32 = arith.constant 3 : i32
    %91 = vector.broadcast %c3_i32 : i32 to vector<8x1xi32>
    %92 = arith.cmpi eq, %8, %91 : vector<8x1xi32>
    %93 = vector.shape_cast %92 : vector<8x1xi1> to vector<8x1xi1>
    %94 = vector.broadcast %93 : vector<8x1xi1> to vector<8x32xi1>
    %95 = arith.select %94, %90, %67 : vector<8x32xi1>, vector<8x32xf32>
    %96 = vector.extract_strided_slice %3 {offsets = [0, 48], sizes = [8, 16], strides = [1, 1]} : vector<8x128xf32> to vector<8x16xf32>
    %cst_25 = arith.constant dense<0.000000e+00> : vector<8x128xf32>
    %97 = tpu.matmul %96, %0, %cst_25 {dimension_numbers = #tpu.dot_dimension_numbers<[1], [0], [0], [1], [0, 0, 1, 1], [], []>} : vector<8x16xf32>, vector<16x128xf32>, vector<8x128xf32> -> vector<8x128xf32>
    %98 = arith.addf %97, %2 : vector<8x128xf32>
    %cst_26 = arith.constant dense<0.000000e+00> : vector<8x128xf32>
    %99 = tpu.matmul %90, %1, %cst_26 {dimension_numbers = #tpu.dot_dimension_numbers<[1], [0], [0], [1], [0, 0, 1, 1], [], []>} : vector<8x32xf32>, vector<32x128xf32>, vector<8x128xf32> -> vector<8x128xf32>
    %100 = arith.addf %98, %99 : vector<8x128xf32>
    %101 = arith.negf %100 : vector<8x128xf32>
    %102 = math.exp %101 : vector<8x128xf32>
    %cst_27 = arith.constant 1.000000e+00 : f32
    %103 = vector.broadcast %cst_27 : f32 to vector<8x128xf32>
    %104 = arith.addf %103, %102 : vector<8x128xf32>
    %105 = arith.divf %103, %104 : vector<8x128xf32>
    %106 = vector.extract_strided_slice %105 {offsets = [0, 0], sizes = [8, 32], strides = [1, 1]} : vector<8x128xf32> to vector<8x32xf32>
    %107 = vector.extract_strided_slice %105 {offsets = [0, 32], sizes = [8, 32], strides = [1, 1]} : vector<8x128xf32> to vector<8x32xf32>
    %108 = vector.extract_strided_slice %105 {offsets = [0, 64], sizes = [8, 32], strides = [1, 1]} : vector<8x128xf32> to vector<8x32xf32>
    %cst_28 = arith.constant 2.000000e+00 : f32
    %109 = vector.broadcast %cst_28 : f32 to vector<8x32xf32>
    %110 = arith.mulf %109, %108 : vector<8x32xf32>
    %cst_29 = arith.constant 1.000000e+00 : f32
    %111 = vector.broadcast %cst_29 : f32 to vector<8x32xf32>
    %112 = arith.subf %110, %111 : vector<8x32xf32>
    %113 = vector.extract_strided_slice %105 {offsets = [0, 96], sizes = [8, 32], strides = [1, 1]} : vector<8x128xf32> to vector<8x32xf32>
    %114 = arith.mulf %107, %88 : vector<8x32xf32>
    %115 = arith.mulf %106, %112 : vector<8x32xf32>
    %116 = arith.addf %114, %115 : vector<8x32xf32>
    %117 = math.tanh %116 : vector<8x32xf32>
    %118 = arith.mulf %113, %117 : vector<8x32xf32>
    %c4_i32 = arith.constant 4 : i32
    %119 = vector.broadcast %c4_i32 : i32 to vector<8x1xi32>
    %120 = arith.cmpi eq, %8, %119 : vector<8x1xi32>
    %121 = vector.shape_cast %120 : vector<8x1xi1> to vector<8x1xi1>
    %122 = vector.broadcast %121 : vector<8x1xi1> to vector<8x32xi1>
    %123 = arith.select %122, %118, %95 : vector<8x32xi1>, vector<8x32xf32>
    %124 = vector.extract_strided_slice %3 {offsets = [0, 64], sizes = [8, 16], strides = [1, 1]} : vector<8x128xf32> to vector<8x16xf32>
    %cst_30 = arith.constant dense<0.000000e+00> : vector<8x128xf32>
    %125 = tpu.matmul %124, %0, %cst_30 {dimension_numbers = #tpu.dot_dimension_numbers<[1], [0], [0], [1], [0, 0, 1, 1], [], []>} : vector<8x16xf32>, vector<16x128xf32>, vector<8x128xf32> -> vector<8x128xf32>
    %126 = arith.addf %125, %2 : vector<8x128xf32>
    %cst_31 = arith.constant dense<0.000000e+00> : vector<8x128xf32>
    %127 = tpu.matmul %118, %1, %cst_31 {dimension_numbers = #tpu.dot_dimension_numbers<[1], [0], [0], [1], [0, 0, 1, 1], [], []>} : vector<8x32xf32>, vector<32x128xf32>, vector<8x128xf32> -> vector<8x128xf32>
    %128 = arith.addf %126, %127 : vector<8x128xf32>
    %129 = arith.negf %128 : vector<8x128xf32>
    %130 = math.exp %129 : vector<8x128xf32>
    %cst_32 = arith.constant 1.000000e+00 : f32
    %131 = vector.broadcast %cst_32 : f32 to vector<8x128xf32>
    %132 = arith.addf %131, %130 : vector<8x128xf32>
    %133 = arith.divf %131, %132 : vector<8x128xf32>
    %134 = vector.extract_strided_slice %133 {offsets = [0, 0], sizes = [8, 32], strides = [1, 1]} : vector<8x128xf32> to vector<8x32xf32>
    %135 = vector.extract_strided_slice %133 {offsets = [0, 32], sizes = [8, 32], strides = [1, 1]} : vector<8x128xf32> to vector<8x32xf32>
    %136 = vector.extract_strided_slice %133 {offsets = [0, 64], sizes = [8, 32], strides = [1, 1]} : vector<8x128xf32> to vector<8x32xf32>
    %cst_33 = arith.constant 2.000000e+00 : f32
    %137 = vector.broadcast %cst_33 : f32 to vector<8x32xf32>
    %138 = arith.mulf %137, %136 : vector<8x32xf32>
    %cst_34 = arith.constant 1.000000e+00 : f32
    %139 = vector.broadcast %cst_34 : f32 to vector<8x32xf32>
    %140 = arith.subf %138, %139 : vector<8x32xf32>
    %141 = vector.extract_strided_slice %133 {offsets = [0, 96], sizes = [8, 32], strides = [1, 1]} : vector<8x128xf32> to vector<8x32xf32>
    %142 = arith.mulf %135, %116 : vector<8x32xf32>
    %143 = arith.mulf %134, %140 : vector<8x32xf32>
    %144 = arith.addf %142, %143 : vector<8x32xf32>
    %145 = math.tanh %144 : vector<8x32xf32>
    %146 = arith.mulf %141, %145 : vector<8x32xf32>
    %c5_i32 = arith.constant 5 : i32
    %147 = vector.broadcast %c5_i32 : i32 to vector<8x1xi32>
    %148 = arith.cmpi eq, %8, %147 : vector<8x1xi32>
    %149 = vector.shape_cast %148 : vector<8x1xi1> to vector<8x1xi1>
    %150 = vector.broadcast %149 : vector<8x1xi1> to vector<8x32xi1>
    %151 = arith.select %150, %146, %123 : vector<8x32xi1>, vector<8x32xf32>
    %152 = vector.extract_strided_slice %3 {offsets = [0, 80], sizes = [8, 16], strides = [1, 1]} : vector<8x128xf32> to vector<8x16xf32>
    %cst_35 = arith.constant dense<0.000000e+00> : vector<8x128xf32>
    %153 = tpu.matmul %152, %0, %cst_35 {dimension_numbers = #tpu.dot_dimension_numbers<[1], [0], [0], [1], [0, 0, 1, 1], [], []>} : vector<8x16xf32>, vector<16x128xf32>, vector<8x128xf32> -> vector<8x128xf32>
    %154 = arith.addf %153, %2 : vector<8x128xf32>
    %cst_36 = arith.constant dense<0.000000e+00> : vector<8x128xf32>
    %155 = tpu.matmul %146, %1, %cst_36 {dimension_numbers = #tpu.dot_dimension_numbers<[1], [0], [0], [1], [0, 0, 1, 1], [], []>} : vector<8x32xf32>, vector<32x128xf32>, vector<8x128xf32> -> vector<8x128xf32>
    %156 = arith.addf %154, %155 : vector<8x128xf32>
    %157 = arith.negf %156 : vector<8x128xf32>
    %158 = math.exp %157 : vector<8x128xf32>
    %cst_37 = arith.constant 1.000000e+00 : f32
    %159 = vector.broadcast %cst_37 : f32 to vector<8x128xf32>
    %160 = arith.addf %159, %158 : vector<8x128xf32>
    %161 = arith.divf %159, %160 : vector<8x128xf32>
    %162 = vector.extract_strided_slice %161 {offsets = [0, 0], sizes = [8, 32], strides = [1, 1]} : vector<8x128xf32> to vector<8x32xf32>
    %163 = vector.extract_strided_slice %161 {offsets = [0, 32], sizes = [8, 32], strides = [1, 1]} : vector<8x128xf32> to vector<8x32xf32>
    %164 = vector.extract_strided_slice %161 {offsets = [0, 64], sizes = [8, 32], strides = [1, 1]} : vector<8x128xf32> to vector<8x32xf32>
    %cst_38 = arith.constant 2.000000e+00 : f32
    %165 = vector.broadcast %cst_38 : f32 to vector<8x32xf32>
    %166 = arith.mulf %165, %164 : vector<8x32xf32>
    %cst_39 = arith.constant 1.000000e+00 : f32
    %167 = vector.broadcast %cst_39 : f32 to vector<8x32xf32>
    %168 = arith.subf %166, %167 : vector<8x32xf32>
    %169 = vector.extract_strided_slice %161 {offsets = [0, 96], sizes = [8, 32], strides = [1, 1]} : vector<8x128xf32> to vector<8x32xf32>
    %170 = arith.mulf %163, %144 : vector<8x32xf32>
    %171 = arith.mulf %162, %168 : vector<8x32xf32>
    %172 = arith.addf %170, %171 : vector<8x32xf32>
    %173 = math.tanh %172 : vector<8x32xf32>
    %174 = arith.mulf %169, %173 : vector<8x32xf32>
    %c6_i32 = arith.constant 6 : i32
    %175 = vector.broadcast %c6_i32 : i32 to vector<8x1xi32>
    %176 = arith.cmpi eq, %8, %175 : vector<8x1xi32>
    %177 = vector.shape_cast %176 : vector<8x1xi1> to vector<8x1xi1>
    %178 = vector.broadcast %177 : vector<8x1xi1> to vector<8x32xi1>
    %179 = arith.select %178, %174, %151 : vector<8x32xi1>, vector<8x32xf32>
    %180 = vector.extract_strided_slice %3 {offsets = [0, 96], sizes = [8, 16], strides = [1, 1]} : vector<8x128xf32> to vector<8x16xf32>
    %cst_40 = arith.constant dense<0.000000e+00> : vector<8x128xf32>
    %181 = tpu.matmul %180, %0, %cst_40 {dimension_numbers = #tpu.dot_dimension_numbers<[1], [0], [0], [1], [0, 0, 1, 1], [], []>} : vector<8x16xf32>, vector<16x128xf32>, vector<8x128xf32> -> vector<8x128xf32>
    %182 = arith.addf %181, %2 : vector<8x128xf32>
    %cst_41 = arith.constant dense<0.000000e+00> : vector<8x128xf32>
    %183 = tpu.matmul %174, %1, %cst_41 {dimension_numbers = #tpu.dot_dimension_numbers<[1], [0], [0], [1], [0, 0, 1, 1], [], []>} : vector<8x32xf32>, vector<32x128xf32>, vector<8x128xf32> -> vector<8x128xf32>
    %184 = arith.addf %182, %183 : vector<8x128xf32>
    %185 = arith.negf %184 : vector<8x128xf32>
    %186 = math.exp %185 : vector<8x128xf32>
    %cst_42 = arith.constant 1.000000e+00 : f32
    %187 = vector.broadcast %cst_42 : f32 to vector<8x128xf32>
    %188 = arith.addf %187, %186 : vector<8x128xf32>
    %189 = arith.divf %187, %188 : vector<8x128xf32>
    %190 = vector.extract_strided_slice %189 {offsets = [0, 0], sizes = [8, 32], strides = [1, 1]} : vector<8x128xf32> to vector<8x32xf32>
    %191 = vector.extract_strided_slice %189 {offsets = [0, 32], sizes = [8, 32], strides = [1, 1]} : vector<8x128xf32> to vector<8x32xf32>
    %192 = vector.extract_strided_slice %189 {offsets = [0, 64], sizes = [8, 32], strides = [1, 1]} : vector<8x128xf32> to vector<8x32xf32>
    %cst_43 = arith.constant 2.000000e+00 : f32
    %193 = vector.broadcast %cst_43 : f32 to vector<8x32xf32>
    %194 = arith.mulf %193, %192 : vector<8x32xf32>
    %cst_44 = arith.constant 1.000000e+00 : f32
    %195 = vector.broadcast %cst_44 : f32 to vector<8x32xf32>
    %196 = arith.subf %194, %195 : vector<8x32xf32>
    %197 = vector.extract_strided_slice %189 {offsets = [0, 96], sizes = [8, 32], strides = [1, 1]} : vector<8x128xf32> to vector<8x32xf32>
    %198 = arith.mulf %191, %172 : vector<8x32xf32>
    %199 = arith.mulf %190, %196 : vector<8x32xf32>
    %200 = arith.addf %198, %199 : vector<8x32xf32>
    %201 = math.tanh %200 : vector<8x32xf32>
    %202 = arith.mulf %197, %201 : vector<8x32xf32>
    %c7_i32 = arith.constant 7 : i32
    %203 = vector.broadcast %c7_i32 : i32 to vector<8x1xi32>
    %204 = arith.cmpi eq, %8, %203 : vector<8x1xi32>
    %205 = vector.shape_cast %204 : vector<8x1xi1> to vector<8x1xi1>
    %206 = vector.broadcast %205 : vector<8x1xi1> to vector<8x32xi1>
    %207 = arith.select %206, %202, %179 : vector<8x32xi1>, vector<8x32xf32>
    %208 = vector.extract_strided_slice %3 {offsets = [0, 112], sizes = [8, 16], strides = [1, 1]} : vector<8x128xf32> to vector<8x16xf32>
    %cst_45 = arith.constant dense<0.000000e+00> : vector<8x128xf32>
    %209 = tpu.matmul %208, %0, %cst_45 {dimension_numbers = #tpu.dot_dimension_numbers<[1], [0], [0], [1], [0, 0, 1, 1], [], []>} : vector<8x16xf32>, vector<16x128xf32>, vector<8x128xf32> -> vector<8x128xf32>
    %210 = arith.addf %209, %2 : vector<8x128xf32>
    %cst_46 = arith.constant dense<0.000000e+00> : vector<8x128xf32>
    %211 = tpu.matmul %202, %1, %cst_46 {dimension_numbers = #tpu.dot_dimension_numbers<[1], [0], [0], [1], [0, 0, 1, 1], [], []>} : vector<8x32xf32>, vector<32x128xf32>, vector<8x128xf32> -> vector<8x128xf32>
    %212 = arith.addf %210, %211 : vector<8x128xf32>
    %213 = arith.negf %212 : vector<8x128xf32>
    %214 = math.exp %213 : vector<8x128xf32>
    %cst_47 = arith.constant 1.000000e+00 : f32
    %215 = vector.broadcast %cst_47 : f32 to vector<8x128xf32>
    %216 = arith.addf %215, %214 : vector<8x128xf32>
    %217 = arith.divf %215, %216 : vector<8x128xf32>
    %218 = vector.extract_strided_slice %217 {offsets = [0, 0], sizes = [8, 32], strides = [1, 1]} : vector<8x128xf32> to vector<8x32xf32>
    %219 = vector.extract_strided_slice %217 {offsets = [0, 32], sizes = [8, 32], strides = [1, 1]} : vector<8x128xf32> to vector<8x32xf32>
    %220 = vector.extract_strided_slice %217 {offsets = [0, 64], sizes = [8, 32], strides = [1, 1]} : vector<8x128xf32> to vector<8x32xf32>
    %cst_48 = arith.constant 2.000000e+00 : f32
    %221 = vector.broadcast %cst_48 : f32 to vector<8x32xf32>
    %222 = arith.mulf %221, %220 : vector<8x32xf32>
    %cst_49 = arith.constant 1.000000e+00 : f32
    %223 = vector.broadcast %cst_49 : f32 to vector<8x32xf32>
    %224 = arith.subf %222, %223 : vector<8x32xf32>
    %225 = vector.extract_strided_slice %217 {offsets = [0, 96], sizes = [8, 32], strides = [1, 1]} : vector<8x128xf32> to vector<8x32xf32>
    %226 = arith.mulf %219, %200 : vector<8x32xf32>
    %227 = arith.mulf %218, %224 : vector<8x32xf32>
    %228 = arith.addf %226, %227 : vector<8x32xf32>
    %229 = math.tanh %228 : vector<8x32xf32>
    %230 = arith.mulf %225, %229 : vector<8x32xf32>
    %c8_i32_50 = arith.constant 8 : i32
    %231 = vector.broadcast %c8_i32_50 : i32 to vector<8x1xi32>
    %232 = arith.cmpi eq, %8, %231 : vector<8x1xi32>
    %233 = vector.shape_cast %232 : vector<8x1xi1> to vector<8x1xi1>
    %234 = vector.broadcast %233 : vector<8x1xi1> to vector<8x32xi1>
    %235 = arith.select %234, %230, %207 : vector<8x32xi1>, vector<8x32xf32>
    %c120 = arith.constant 120 : index
    %c0_51 = arith.constant 0 : index
    %236 = vector.load %arg2[%c120, %c0_51] : memref<128x128xf32, #tpu.memory_space<vmem>>, vector<4x128xf32>
    %237 = tpu.iota {dimensions = array<i32: 0>} : vector<4x8xi32>
    %238 = tpu.iota {dimensions = array<i32: 1>} : vector<4x8xi32>
    %c56 = arith.constant 56 : index
    %c0_52 = arith.constant 0 : index
    %239 = vector.load %arg2[%c56, %c0_52] : memref<128x128xf32, #tpu.memory_space<vmem>>, vector<32x128xf32>
    %cst_53 = arith.constant dense<0.000000e+00> : vector<8x128xf32>
    %240 = tpu.matmul %235, %239, %cst_53 {dimension_numbers = #tpu.dot_dimension_numbers<[1], [0], [0], [1], [0, 0, 1, 1], [], []>} : vector<8x32xf32>, vector<32x128xf32>, vector<8x128xf32> -> vector<8x128xf32>
    %c2_i32_54 = arith.constant 2 : i32
    %241 = vector.broadcast %c2_i32_54 : i32 to vector<4x8xi32>
    %242 = arith.muli %237, %241 : vector<4x8xi32>
    %c0_i32 = arith.constant 0 : i32
    %243 = vector.broadcast %c0_i32 : i32 to vector<4x8xi32>
    %244 = arith.addi %242, %243 : vector<4x8xi32>
    %245 = arith.cmpi eq, %238, %244 : vector<4x8xi32>
    %246 = arith.extui %245 : vector<4x8xi1> to vector<4x8xi32>
    %247 = arith.sitofp %246 : vector<4x8xi32> to vector<4x8xf32>
    %cst_55 = arith.constant dense<0.000000e+00> : vector<4x128xf32>
    %248 = tpu.matmul %247, %240, %cst_55 {dimension_numbers = #tpu.dot_dimension_numbers<[1], [0], [0], [1], [0, 0, 1, 1], [], []>} : vector<4x8xf32>, vector<8x128xf32>, vector<4x128xf32> -> vector<4x128xf32>
    %249 = arith.addf %236, %248 : vector<4x128xf32>
    %c88 = arith.constant 88 : index
    %c0_56 = arith.constant 0 : index
    %250 = vector.load %arg2[%c88, %c0_56] : memref<128x128xf32, #tpu.memory_space<vmem>>, vector<32x128xf32>
    %cst_57 = arith.constant dense<0.000000e+00> : vector<8x128xf32>
    %251 = tpu.matmul %235, %250, %cst_57 {dimension_numbers = #tpu.dot_dimension_numbers<[1], [0], [0], [1], [0, 0, 1, 1], [], []>} : vector<8x32xf32>, vector<32x128xf32>, vector<8x128xf32> -> vector<8x128xf32>
    %c2_i32_58 = arith.constant 2 : i32
    %252 = vector.broadcast %c2_i32_58 : i32 to vector<4x8xi32>
    %253 = arith.muli %237, %252 : vector<4x8xi32>
    %c1_i32_59 = arith.constant 1 : i32
    %254 = vector.broadcast %c1_i32_59 : i32 to vector<4x8xi32>
    %255 = arith.addi %253, %254 : vector<4x8xi32>
    %256 = arith.cmpi eq, %238, %255 : vector<4x8xi32>
    %257 = arith.extui %256 : vector<4x8xi1> to vector<4x8xi32>
    %258 = arith.sitofp %257 : vector<4x8xi32> to vector<4x8xf32>
    %cst_60 = arith.constant dense<0.000000e+00> : vector<4x128xf32>
    %259 = tpu.matmul %258, %251, %cst_60 {dimension_numbers = #tpu.dot_dimension_numbers<[1], [0], [0], [1], [0, 0, 1, 1], [], []>} : vector<4x8xf32>, vector<8x128xf32>, vector<4x128xf32> -> vector<4x128xf32>
    %260 = arith.addf %249, %259 : vector<4x128xf32>
    %261 = vector.extract_strided_slice %260 {offsets = [0, 0], sizes = [4, 5], strides = [1, 1]} : vector<4x128xf32> to vector<4x5xf32>
    %c0_61 = arith.constant 0 : index
    %c0_62 = arith.constant 0 : index
    %262 = vector.load %arg3[%c0_61, %c0_62] : memref<4x5xf32, #tpu.memory_space<vmem>>, vector<4x5xf32>
    tpu.vector_store %arg3[%c0_61, %c0_62], %261 {strides = array<i32>} : memref<4x5xf32, #tpu.memory_space<vmem>>, vector<4x5xf32>,
    return
  }
}

</mosaic_0001>

<llo_original>
// kernel: probe_forward.1
$region0: #{probe_forward.1}
  #allocation0 [shape = 'u32[]', space=smem, size = 0x4, offset = 0x4, fixed_abs, tag = 'smem constant byte address 0x4 - core index']
  #allocation1 [shape = 'u32[72,128]{1,0:T(1,128)}', space=vmem, size = 0x9000, scoped, tag = 'internal scratch']
  %s0 = inlined_call_operand.vmem [shape: f32[8,128], index: 0, kind: input, shape index: {}]
  %s1 = inlined_call_operand.vmem [shape: s32[8,1], index: 1, kind: input, shape index: {}]
  %s2 = inlined_call_operand.hbm [shape: f32[128,128], index: 2, kind: input, shape index: {}]
  %s3 = inlined_call_operand.hbm [shape: f32[4,5], index: 3, kind: output, shape index: {}]
  %s4 = sld [smem:[#allocation0]]
  $region26: #{probe_forward.1} parent=0
    _
  %s6 = ssub.s32 1, %s4
  %s7 = scalar_select 0, %s6, %s4
  $region1: #{probe_forward.1} parent=0
    #allocation2 [shape = 'u8[65536]{0}', space=vmem, size = 0x10000, scoped, tag = 'input window, operand 2, single buffered']
    #allocation3 [shape = 's32[1]{0}', space=sflag, size = 0x4, scoped, tag = 'scoped memory for probe_forward.1']
    #allocation4 [shape = 's32[1]{0}', space=sflag, size = 0x4, scoped, tag = 'scoped memory for probe_forward.1']
    #allocation5 [shape = 'u8[2048]{0}', space=vmem, size = 0x800, scoped, tag = 'output window, operand 0, single buffered']
    %8 = vsyncpa [#allocation3], 0
    %9 = vsyncpa [#allocation4], 0
    // Predicated region
    $region2: #{probe_forward.1} parent=1 // pred_check
      _
    $region3: #{probe_forward.1} parent=1 // pred_check_branch
      %11 = sbr.rel (0) target = $region5
    $region4: #{probe_forward.1} parent=1 // pred_region
      _
    $region5: #{probe_forward.1} parent=1 // pred_fallthru
      _
    // Predicated region
    $region6: #{probe_forward.1} parent=1 // pred_check
      _
    $region7: #{probe_forward.1} parent=1 // pred_check_branch
      %13 = sbr.rel (0) target = $region9
    $region8: #{probe_forward.1} parent=1 // pred_region
      _
    $region9: #{probe_forward.1} parent=1 // pred_fallthru
      _
    // Predicated region
    $region10: #{probe_forward.1} parent=1 // pred_check
      _
    $region11: #{probe_forward.1} parent=1 // pred_check_branch
      %15 = sbr.rel (0) target = $region13
    $region12: #{probe_forward.1} parent=1 // pred_region
      %17 = vsyncadd [#allocation3], 0
      %s18 = sshll.u32 %s2, 4
      %s19 = int_to_ptr.hbm [resolvable:$true] %s18
      %s20 = sshll.u32 [#allocation2], 4
      %s21 = int_to_ptr.vmem [resolvable:$true] %s20
      %26 = dma.hbm_to_vmem [thread:$0]  %s19, 2048, %s21, [#allocation3], 128, 128, 8
    $region13: #{probe_forward.1} parent=1 // pred_fallthru
      _
    // Predicated region
    $region14: #{probe_forward.1} parent=1 // pred_check
      _
    $region15: #{probe_forward.1} parent=1 // pred_check_branch
      %28 = sbr.rel (0) target = $region17
    $region16: #{probe_forward.1} parent=1 // pred_region
      %30 = dma.done [#allocation3], 2048
    $region17: #{probe_forward.1} parent=1 // pred_fallthru
      _
    %v31 = vld [vmem:[#allocation2] sm:$0xff]
    %v32 = vld [vmem:[#allocation2 + $0x8] sm:$0xff]
    %v33 = vld [vmem:[#allocation2 + $0x10] sm:$0xff]
    %v34 = vld [vmem:[#allocation2 + $0x18] sm:$0xff]
    %v35 = vld [vmem:[#allocation2 + $0x20] sm:$0xff]
    %v36 = vld [vmem:[#allocation2 + $0x28] sm:$0xff]
    %v37 = vld [vmem:[#allocation2 + $0x30] sm:$0xff]
    %v38 = vld [vmem:[%s0] sm:$0xff]
    %v39 = vld [vmem:[%s1] sm:$0xff]
    %vm40 = vcmp.gt.s32.totalorder %v39, 1
    %v41 = vsel %vm40, %v39, 1
    %vm42 = vcmp.lt.s32.totalorder %v41, 8
    %v43 = vsel %vm42, %v41, 8
    %vm44 = vcmask 130048
    %v46 = vsel %vm44, %v38, 0
    %48 = vmatpush.msra.mxu0 0.0
    %49 = vmatpush.msra.mxu0 0.0
    %50 = vmatpush.msra.mxu0 0.0
    %51 = vmatpush.msra.mxu0 0.0
    %52 = vmatpush.msra.mxu0 0.0
    %53 = vmatpush.msra.mxu0 0.0
    %54 = vmatpush.msra.mxu0 0.0
    %55 = vmatpush.msra.mxu0 0.0
    %56 = vmatpush.msra.mxu0 0.0
    %57 = vmatpush.msra.mxu0 0.0
    %58 = vmatpush.msra.mxu0 0.0
    %59 = vmatpush.msra.mxu0 0.0
    %60 = vmatpush.msra.mxu0 0.0
    %61 = vmatpush.msra.mxu0 0.0
    %62 = vmatpush.msra.mxu0 %v32
    %63 = vmatpush.msra.mxu0 %v31
    %64 = vmatmul.f32.gmra.mxu0 %v46
    %v65 = vpop.f32.mrf.mxu0
    %v66 = vadd.f32 %v37, %v65
    %67 = vdwg.mxu0
    %vm68 = vcmask 261120
    %v70 = vsel %vm68, 0.0, 0
    %72 = vmatpush.msra.mxu0 0.0
    %73 = vmatpush.msra.mxu0 0.0
    %74 = vmatpush.msra.mxu0 0.0
    %75 = vmatpush.msra.mxu0 0.0
    %76 = vmatpush.msra.mxu0 0.0
    %77 = vmatpush.msra.mxu0 0.0
    %78 = vmatpush.msra.mxu0 0.0
    %79 = vmatpush.msra.mxu0 0.0
    %80 = vmatpush.msra.mxu0 0.0
    %81 = vmatpush.msra.mxu0 0.0
    %82 = vmatpush.msra.mxu0 0.0
    %83 = vmatpush.msra.mxu0 0.0
    %84 = vmatpush.msra.mxu0 %v36
    %85 = vmatpush.msra.mxu0 %v35
    %86 = vmatpush.msra.mxu0 %v34
    %87 = vmatpush.msra.mxu0 %v33
    %88 = vmatmul.f32.gmra.mxu0 %v70
    %v89 = vpop.f32.mrf.mxu0
    %v90 = vadd.f32 0.0, %v89
    %91 = vdwg.mxu0
    %v92 = vadd.f32 %v66, %v90
    %v93 = vxor.u32 %v92, 2147483648
    %v94 = vmul.f32 %v93, 1.442695
    %v95 = vpow.pop %v94
    %v96 = vadd.f32 %v95, 1.0
    %v97 = vrcp.pop %v96
    %v98 = vmul.f32 %v96, %v97
    %v99 = vsub.f32 1.0, %v98
    %v100 = vmul.f32 %v97, %v99
    %v101 = vadd.f32 %v97, %v100
    %vm102 = vweird.f32 %v96
    %vm103 = vweird.f32 %v97
    %vm104 = vmor %vm102, %vm103
    %v105 = vsel %vm104, %v97, %v101
    %v106 = vand.u32 2147483647, %v96
    %vm107 = vcmp.eq.f32.partialorder %v106, 8.507059e+37
    %v108 = vand.u32 %v96, 2147483648
    %v109 = vor.u32 1.1754944e-38, %v108
    %v110 = vsel %vm107, %v109, %v105
    %v111 = vmul.f32 1.0, %v110
    %v112 = vmul.f32 %v111, 2.0
    %v113 = vsub.f32 %v112, 1.0
    %v114 = vmul.f32 %v111, 0.0
    %116 = vrot.lane.b32.xlu0 %v113, 64
    %v117 = vpop.permute.xlu0 %116
    %v119 = vmul.f32 %v111, %v117
    %121 = vrot.lane.b32.xlu0 %v119, 32
    %v122 = vpop.permute.xlu0 %121
    %v124 = vadd.f32 %v114, %v122
    %v125 = vtanh.pop %v124
    %127 = vrot.lane.b32.xlu0 %v125, 64
    %v128 = vpop.permute.xlu0 %127
    %v130 = vmul.f32 %v111, %v128
    %vm131 = vcmp.eq.s32.totalorder %v43, 1
    %v132 = vsel %vm131, 1, 0
    %133 = vset.pattern.permute.xlu0 0
    %134 = vperm.xlu0 %133, %v132
    %v135 = vpop.permute.xlu0 %134
    %vm136 = vcmp.eq.s32.totalorder %v135, 1
    %v137 = vsel %vm136, %v130, 0.0
    %138 = vrot.lane.b32.xlu0 %v38, 112
    %v139 = vpop.permute.xlu0 %138
    %v140 = vsel %vm44, %v139, 0
    %142 = vmatpush.msra.mxu0 0.0
    %143 = vmatpush.msra.mxu0 0.0
    %144 = vmatpush.msra.mxu0 0.0
    %145 = vmatpush.msra.mxu0 0.0
    %146 = vmatpush.msra.mxu0 0.0
    %147 = vmatpush.msra.mxu0 0.0
    %148 = vmatpush.msra.mxu0 0.0
    %149 = vmatpush.msra.mxu0 0.0
    %150 = vmatpush.msra.mxu0 0.0
    %151 = vmatpush.msra.mxu0 0.0
    %152 = vmatpush.msra.mxu0 0.0
    %153 = vmatpush.msra.mxu0 0.0
    %154 = vmatpush.msra.mxu0 0.0
    %155 = vmatpush.msra.mxu0 0.0
    %156 = vmatpush.msra.mxu0 %v32
    %157 = vmatpush.msra.mxu0 %v31
    %158 = vmatmul.f32.gmra.mxu0 %v140
    %v159 = vpop.f32.mrf.mxu0
    %v160 = vadd.f32 %v37, %v159
    %161 = vdwg.mxu0
    %163 = vrot.lane.b32.xlu0 %v130, 32
    %v164 = vpop.permute.xlu0 %163
    %v165 = vsel %vm68, %v164, 0
    %167 = vmatpush.msra.mxu0 0.0
    %168 = vmatpush.msra.mxu0 0.0
    %169 = vmatpush.msra.mxu0 0.0
    %170 = vmatpush.msra.mxu0 0.0
    %171 = vmatpush.msra.mxu0 0.0
    %172 = vmatpush.msra.mxu0 0.0
    %173 = vmatpush.msra.mxu0 0.0
    %174 = vmatpush.msra.mxu0 0.0
    %175 = vmatpush.msra.mxu0 0.0
    %176 = vmatpush.msra.mxu0 0.0
    %177 = vmatpush.msra.mxu0 0.0
    %178 = vmatpush.msra.mxu0 0.0
    %179 = vmatpush.msra.mxu0 %v36
    %180 = vmatpush.msra.mxu0 %v35
    %181 = vmatpush.msra.mxu0 %v34
    %182 = vmatpush.msra.mxu0 %v33
    %183 = vmatmul.f32.gmra.mxu0 %v165
    %v184 = vpop.f32.mrf.mxu0
    %v185 = vadd.f32 0.0, %v184
    %186 = vdwg.mxu0
    %v187 = vadd.f32 %v160, %v185
    %v188 = vxor.u32 %v187, 2147483648
    %v189 = vmul.f32 %v188, 1.442695
    %v190 = vpow.pop %v189
    %v191 = vadd.f32 %v190, 1.0
    %v192 = vrcp.pop %v191
    %v193 = vmul.f32 %v191, %v192
    %v194 = vsub.f32 1.0, %v193
    %v195 = vmul.f32 %v192, %v194
    %v196 = vadd.f32 %v192, %v195
    %vm197 = vweird.f32 %v191
    %vm198 = vweird.f32 %v192
    %vm199 = vmor %vm197, %vm198
    %v200 = vsel %vm199, %v192, %v196
    %v201 = vand.u32 2147483647, %v191
    %vm202 = vcmp.eq.f32.partialorder %v201, 8.507059e+37
    %v203 = vand.u32 %v191, 2147483648
    %v204 = vor.u32 1.1754944e-38, %v203
    %v205 = vsel %vm202, %v204, %v200
    %v206 = vmul.f32 1.0, %v205
    %v207 = vmul.f32 %v206, 2.0
    %v208 = vsub.f32 %v207, 1.0
    %v209 = vmul.f32 %v206, %v124
    %211 = vrot.lane.b32.xlu0 %v208, 64
    %v212 = vpop.permute.xlu0 %211
    %v214 = vmul.f32 %v206, %v212
    %216 = vrot.lane.b32.xlu0 %v214, 32
    %v217 = vpop.permute.xlu0 %216
    %v219 = vadd.f32 %v209, %v217
    %v220 = vtanh.pop %v219
    %222 = vrot.lane.b32.xlu0 %v220, 64
    %v223 = vpop.permute.xlu0 %222
    %v225 = vmul.f32 %v206, %v223
    %vm226 = vcmp.eq.s32.totalorder %v43, 2
    %v227 = vsel %vm226, 1, 0
    %228 = vset.pattern.permute.xlu0 0
    %229 = vperm.xlu0 %228, %v227
    %v230 = vpop.permute.xlu0 %229
    %vm231 = vcmp.eq.s32.totalorder %v230, 1
    %v232 = vsel %vm231, %v225, %v137
    %233 = vrot.lane.b32.xlu0 %v38, 96
    %v234 = vpop.permute.xlu0 %233
    %v235 = vsel %vm44, %v234, 0
    %237 = vmatpush.msra.mxu0 0.0
    %238 = vmatpush.msra.mxu0 0.0
    %239 = vmatpush.msra.mxu0 0.0
    %240 = vmatpush.msra.mxu0 0.0
    %241 = vmatpush.msra.mxu0 0.0
    %242 = vmatpush.msra.mxu0 0.0
    %243 = vmatpush.msra.mxu0 0.0
    %244 = vmatpush.msra.mxu0 0.0
    %245 = vmatpush.msra.mxu0 0.0
    %246 = vmatpush.msra.mxu0 0.0
    %247 = vmatpush.msra.mxu0 0.0
    %248 = vmatpush.msra.mxu0 0.0
    %249 = vmatpush.msra.mxu0 0.0
    %250 = vmatpush.msra.mxu0 0.0
    %251 = vmatpush.msra.mxu0 %v32
    %252 = vmatpush.msra.mxu0 %v31
    %253 = vmatmul.f32.gmra.mxu0 %v235
    %v254 = vpop.f32.mrf.mxu0
    %v255 = vadd.f32 %v37, %v254
    %256 = vdwg.mxu0
    %258 = vrot.lane.b32.xlu0 %v225, 32
    %v259 = vpop.permute.xlu0 %258
    %v260 = vsel %vm68, %v259, 0
    %262 = vmatpush.msra.mxu0 0.0
    %263 = vmatpush.msra.mxu0 0.0
    %264 = vmatpush.msra.mxu0 0.0
    %265 = vmatpush.msra.mxu0 0.0
    %266 = vmatpush.msra.mxu0 0.0
    %267 = vmatpush.msra.mxu0 0.0
    %268 = vmatpush.msra.mxu0 0.0
    %269 = vmatpush.msra.mxu0 0.0
    %270 = vmatpush.msra.mxu0 0.0
    %271 = vmatpush.msra.mxu0 0.0
    %272 = vmatpush.msra.mxu0 0.0
    %273 = vmatpush.msra.mxu0 0.0
    %274 = vmatpush.msra.mxu0 %v36
    %275 = vmatpush.msra.mxu0 %v35
    %276 = vmatpush.msra.mxu0 %v34
    %277 = vmatpush.msra.mxu0 %v33
    %278 = vmatmul.f32.gmra.mxu0 %v260
    %v279 = vpop.f32.mrf.mxu0
    %v280 = vadd.f32 0.0, %v279
    %281 = vdwg.mxu0
    %v282 = vadd.f32 %v255, %v280
    %v283 = vxor.u32 %v282, 2147483648
    %v284 = vmul.f32 %v283, 1.442695
    %v285 = vpow.pop %v284
    %v286 = vadd.f32 %v285, 1.0
    %v287 = vrcp.pop %v286
    %v288 = vmul.f32 %v286, %v287
    %v289 = vsub.f32 1.0, %v288
    %v290 = vmul.f32 %v287, %v289
    %v291 = vadd.f32 %v287, %v290
    %vm292 = vweird.f32 %v286
    %vm293 = vweird.f32 %v287
    %vm294 = vmor %vm292, %vm293
    %v295 = vsel %vm294, %v287, %v291
    %v296 = vand.u32 2147483647, %v286
    %vm297 = vcmp.eq.f32.partialorder %v296, 8.507059e+37
    %v298 = vand.u32 %v286, 2147483648
    %v299 = vor.u32 1.1754944e-38, %v298
    %v300 = vsel %vm297, %v299, %v295
    %v301 = vmul.f32 1.0, %v300
    %v302 = vmul.f32 %v301, 2.0
    %v303 = vsub.f32 %v302, 1.0
    %v304 = vmul.f32 %v301, %v219
    %306 = vrot.lane.b32.xlu0 %v303, 64
    %v307 = vpop.permute.xlu0 %306
    %v309 = vmul.f32 %v301, %v307
    %311 = vrot.lane.b32.xlu0 %v309, 32
    %v312 = vpop.permute.xlu0 %311
    %v314 = vadd.f32 %v304, %v312
    %v315 = vtanh.pop %v314
    %317 = vrot.lane.b32.xlu0 %v315, 64
    %v318 = vpop.permute.xlu0 %317
    %v320 = vmul.f32 %v301, %v318
    %vm321 = vcmp.eq.s32.totalorder %v43, 3
    %v322 = vsel %vm321, 1, 0
    %323 = vset.pattern.permute.xlu0 0
    %324 = vperm.xlu0 %323, %v322
    %v325 = vpop.permute.xlu0 %324
    %vm326 = vcmp.eq.s32.totalorder %v325, 1
    %v327 = vsel %vm326, %v320, %v232
    %328 = vrot.lane.b32.xlu0 %v38, 80
    %v329 = vpop.permute.xlu0 %328
    %v330 = vsel %vm44, %v329, 0
    %332 = vmatpush.msra.mxu0 0.0
    %333 = vmatpush.msra.mxu0 0.0
    %334 = vmatpush.msra.mxu0 0.0
    %335 = vmatpush.msra.mxu0 0.0
    %336 = vmatpush.msra.mxu0 0.0
    %337 = vmatpush.msra.mxu0 0.0
    %338 = vmatpush.msra.mxu0 0.0
    %339 = vmatpush.msra.mxu0 0.0
    %340 = vmatpush.msra.mxu0 0.0
    %341 = vmatpush.msra.mxu0 0.0
    %342 = vmatpush.msra.mxu0 0.0
    %343 = vmatpush.msra.mxu0 0.0
    %344 = vmatpush.msra.mxu0 0.0
    %345 = vmatpush.msra.mxu0 0.0
    %346 = vmatpush.msra.mxu0 %v32
    %347 = vmatpush.msra.mxu0 %v31
    %348 = vmatmul.f32.gmra.mxu0 %v330
    %v349 = vpop.f32.mrf.mxu0
    %v350 = vadd.f32 %v37, %v349
    %351 = vdwg.mxu0
    %353 = vrot.lane.b32.xlu0 %v320, 32
    %v354 = vpop.permute.xlu0 %353
    %v355 = vsel %vm68, %v354, 0
    %357 = vmatpush.msra.mxu0 0.0
    %358 = vmatpush.msra.mxu0 0.0
    %359 = vmatpush.msra.mxu0 0.0
    %360 = vmatpush.msra.mxu0 0.0
    %361 = vmatpush.msra.mxu0 0.0
    %362 = vmatpush.msra.mxu0 0.0
    %363 = vmatpush.msra.mxu0 0.0
    %364 = vmatpush.msra.mxu0 0.0
    %365 = vmatpush.msra.mxu0 0.0
    %366 = vmatpush.msra.mxu0 0.0
    %367 = vmatpush.msra.mxu0 0.0
    %368 = vmatpush.msra.mxu0 0.0
    %369 = vmatpush.msra.mxu0 %v36
    %370 = vmatpush.msra.mxu0 %v35
    %371 = vmatpush.msra.mxu0 %v34
    %372 = vmatpush.msra.mxu0 %v33
    %373 = vmatmul.f32.gmra.mxu0 %v355
    %v374 = vpop.f32.mrf.mxu0
    %v375 = vadd.f32 0.0, %v374
    %376 = vdwg.mxu0
    %v377 = vadd.f32 %v350, %v375
    %v378 = vxor.u32 %v377, 2147483648
    %v379 = vmul.f32 %v378, 1.442695
    %v380 = vpow.pop %v379
    %v381 = vadd.f32 %v380, 1.0
    %v382 = vrcp.pop %v381
    %v383 = vmul.f32 %v381, %v382
    %v384 = vsub.f32 1.0, %v383
    %v385 = vmul.f32 %v382, %v384
    %v386 = vadd.f32 %v382, %v385
    %vm387 = vweird.f32 %v381
    %vm388 = vweird.f32 %v382
    %vm389 = vmor %vm387, %vm388
    %v390 = vsel %vm389, %v382, %v386
    %v391 = vand.u32 2147483647, %v381
    %vm392 = vcmp.eq.f32.partialorder %v391, 8.507059e+37
    %v393 = vand.u32 %v381, 2147483648
    %v394 = vor.u32 1.1754944e-38, %v393
    %v395 = vsel %vm392, %v394, %v390
    %v396 = vmul.f32 1.0, %v395
    %v397 = vmul.f32 %v396, 2.0
    %v398 = vsub.f32 %v397, 1.0
    %v399 = vmul.f32 %v396, %v314
    %401 = vrot.lane.b32.xlu0 %v398, 64
    %v402 = vpop.permute.xlu0 %401
    %v404 = vmul.f32 %v396, %v402
    %406 = vrot.lane.b32.xlu0 %v404, 32
    %v407 = vpop.permute.xlu0 %406
    %v409 = vadd.f32 %v399, %v407
    %v410 = vtanh.pop %v409
    %412 = vrot.lane.b32.xlu0 %v410, 64
    %v413 = vpop.permute.xlu0 %412
    %v415 = vmul.f32 %v396, %v413
    %vm416 = vcmp.eq.s32.totalorder %v43, 4
    %v417 = vsel %vm416, 1, 0
    %418 = vset.pattern.permute.xlu0 0
    %419 = vperm.xlu0 %418, %v417
    %v420 = vpop.permute.xlu0 %419
    %vm421 = vcmp.eq.s32.totalorder %v420, 1
    %v422 = vsel %vm421, %v415, %v327
    %423 = vrot.lane.b32.xlu0 %v38, 64
    %v424 = vpop.permute.xlu0 %423
    %v425 = vsel %vm44, %v424, 0
    %427 = vmatpush.msra.mxu0 0.0
    %428 = vmatpush.msra.mxu0 0.0
    %429 = vmatpush.msra.mxu0 0.0
    %430 = vmatpush.msra.mxu0 0.0
    %431 = vmatpush.msra.mxu0 0.0
    %432 = vmatpush.msra.mxu0 0.0
    %433 = vmatpush.msra.mxu0 0.0
    %434 = vmatpush.msra.mxu0 0.0
    %435 = vmatpush.msra.mxu0 0.0
    %436 = vmatpush.msra.mxu0 0.0
    %437 = vmatpush.msra.mxu0 0.0
    %438 = vmatpush.msra.mxu0 0.0
    %439 = vmatpush.msra.mxu0 0.0
    %440 = vmatpush.msra.mxu0 0.0
    %441 = vmatpush.msra.mxu0 %v32
    %442 = vmatpush.msra.mxu0 %v31
    %443 = vmatmul.f32.gmra.mxu0 %v425
    %v444 = vpop.f32.mrf.mxu0
    %v445 = vadd.f32 %v37, %v444
    %446 = vdwg.mxu0
    %448 = vrot.lane.b32.xlu0 %v415, 32
    %v449 = vpop.permute.xlu0 %448
    %v450 = vsel %vm68, %v449, 0
    %452 = vmatpush.msra.mxu0 0.0
    %453 = vmatpush.msra.mxu0 0.0
    %454 = vmatpush.msra.mxu0 0.0
    %455 = vmatpush.msra.mxu0 0.0
    %456 = vmatpush.msra.mxu0 0.0
    %457 = vmatpush.msra.mxu0 0.0
    %458 = vmatpush.msra.mxu0 0.0
    %459 = vmatpush.msra.mxu0 0.0
    %460 = vmatpush.msra.mxu0 0.0
    %461 = vmatpush.msra.mxu0 0.0
    %462 = vmatpush.msra.mxu0 0.0
    %463 = vmatpush.msra.mxu0 0.0
    %464 = vmatpush.msra.mxu0 %v36
    %465 = vmatpush.msra.mxu0 %v35
    %466 = vmatpush.msra.mxu0 %v34
    %467 = vmatpush.msra.mxu0 %v33
    %468 = vmatmul.f32.gmra.mxu0 %v450
    %v469 = vpop.f32.mrf.mxu0
    %v470 = vadd.f32 0.0, %v469
    %471 = vdwg.mxu0
    %v472 = vadd.f32 %v445, %v470
    %v473 = vxor.u32 %v472, 2147483648
    %v474 = vmul.f32 %v473, 1.442695
    %v475 = vpow.pop %v474
    %v476 = vadd.f32 %v475, 1.0
    %v477 = vrcp.pop %v476
    %v478 = vmul.f32 %v476, %v477
    %v479 = vsub.f32 1.0, %v478
    %v480 = vmul.f32 %v477, %v479
    %v481 = vadd.f32 %v477, %v480
    %vm482 = vweird.f32 %v476
    %vm483 = vweird.f32 %v477
    %vm484 = vmor %vm482, %vm483
    %v485 = vsel %vm484, %v477, %v481
    %v486 = vand.u32 2147483647, %v476
    %vm487 = vcmp.eq.f32.partialorder %v486, 8.507059e+37
    %v488 = vand.u32 %v476, 2147483648
    %v489 = vor.u32 1.1754944e-38, %v488
    %v490 = vsel %vm487, %v489, %v485
    %v491 = vmul.f32 1.0, %v490
    %v492 = vmul.f32 %v491, 2.0
    %v493 = vsub.f32 %v492, 1.0
    %v494 = vmul.f32 %v491, %v409
    %496 = vrot.lane.b32.xlu0 %v493, 64
    %v497 = vpop.permute.xlu0 %496
    %v499 = vmul.f32 %v491, %v497
    %501 = vrot.lane.b32.xlu0 %v499, 32
    %v502 = vpop.permute.xlu0 %501
    %v504 = vadd.f32 %v494, %v502
    %v505 = vtanh.pop %v504
    %507 = vrot.lane.b32.xlu0 %v505, 64
    %v508 = vpop.permute.xlu0 %507
    %v510 = vmul.f32 %v491, %v508
    %vm511 = vcmp.eq.s32.totalorder %v43, 5
    %v512 = vsel %vm511, 1, 0
    %513 = vset.pattern.permute.xlu0 0
    %514 = vperm.xlu0 %513, %v512
    %v515 = vpop.permute.xlu0 %514
    %vm516 = vcmp.eq.s32.totalorder %v515, 1
    %v517 = vsel %vm516, %v510, %v422
    %518 = vrot.lane.b32.xlu0 %v38, 48
    %v519 = vpop.permute.xlu0 %518
    %v520 = vsel %vm44, %v519, 0
    %522 = vmatpush.msra.mxu0 0.0
    %523 = vmatpush.msra.mxu0 0.0
    %524 = vmatpush.msra.mxu0 0.0
    %525 = vmatpush.msra.mxu0 0.0
    %526 = vmatpush.msra.mxu0 0.0
    %527 = vmatpush.msra.mxu0 0.0
    %528 = vmatpush.msra.mxu0 0.0
    %529 = vmatpush.msra.mxu0 0.0
    %530 = vmatpush.msra.mxu0 0.0
    %531 = vmatpush.msra.mxu0 0.0
    %532 = vmatpush.msra.mxu0 0.0
    %533 = vmatpush.msra.mxu0 0.0
    %534 = vmatpush.msra.mxu0 0.0
    %535 = vmatpush.msra.mxu0 0.0
    %536 = vmatpush.msra.mxu0 %v32
    %537 = vmatpush.msra.mxu0 %v31
    %538 = vmatmul.f32.gmra.mxu0 %v520
    %v539 = vpop.f32.mrf.mxu0
    %v540 = vadd.f32 %v37, %v539
    %541 = vdwg.mxu0
    %543 = vrot.lane.b32.xlu0 %v510, 32
    %v544 = vpop.permute.xlu0 %543
    %v545 = vsel %vm68, %v544, 0
    %547 = vmatpush.msra.mxu0 0.0
    %548 = vmatpush.msra.mxu0 0.0
    %549 = vmatpush.msra.mxu0 0.0
    %550 = vmatpush.msra.mxu0 0.0
    %551 = vmatpush.msra.mxu0 0.0
    %552 = vmatpush.msra.mxu0 0.0
    %553 = vmatpush.msra.mxu0 0.0
    %554 = vmatpush.msra.mxu0 0.0
    %555 = vmatpush.msra.mxu0 0.0
    %556 = vmatpush.msra.mxu0 0.0
    %557 = vmatpush.msra.mxu0 0.0
    %558 = vmatpush.msra.mxu0 0.0
    %559 = vmatpush.msra.mxu0 %v36
    %560 = vmatpush.msra.mxu0 %v35
    %561 = vmatpush.msra.mxu0 %v34
    %562 = vmatpush.msra.mxu0 %v33
    %563 = vmatmul.f32.gmra.mxu0 %v545
    %v564 = vpop.f32.mrf.mxu0
    %v565 = vadd.f32 0.0, %v564
    %566 = vdwg.mxu0
    %v567 = vadd.f32 %v540, %v565
    %v568 = vxor.u32 %v567, 2147483648
    %v569 = vmul.f32 %v568, 1.442695
    %v570 = vpow.pop %v569
    %v571 = vadd.f32 %v570, 1.0
    %v572 = vrcp.pop %v571
    %v573 = vmul.f32 %v571, %v572
    %v574 = vsub.f32 1.0, %v573
    %v575 = vmul.f32 %v572, %v574
    %v576 = vadd.f32 %v572, %v575
    %vm577 = vweird.f32 %v571
    %vm578 = vweird.f32 %v572
    %vm579 = vmor %vm577, %vm578
    %v580 = vsel %vm579, %v572, %v576
    %v581 = vand.u32 2147483647, %v571
    %vm582 = vcmp.eq.f32.partialorder %v581, 8.507059e+37
    %v583 = vand.u32 %v571, 2147483648
    %v584 = vor.u32 1.1754944e-38, %v583
    %v585 = vsel %vm582, %v584, %v580
    %v586 = vmul.f32 1.0, %v585
    %v587 = vmul.f32 %v586, 2.0
    %v588 = vsub.f32 %v587, 1.0
    %v589 = vmul.f32 %v586, %v504
    %591 = vrot.lane.b32.xlu0 %v588, 64
    %v592 = vpop.permute.xlu0 %591
    %v594 = vmul.f32 %v586, %v592
    %596 = vrot.lane.b32.xlu0 %v594, 32
    %v597 = vpop.permute.xlu0 %596
    %v599 = vadd.f32 %v589, %v597
    %v600 = vtanh.pop %v599
    %602 = vrot.lane.b32.xlu0 %v600, 64
    %v603 = vpop.permute.xlu0 %602
    %v605 = vmul.f32 %v586, %v603
    %vm606 = vcmp.eq.s32.totalorder %v43, 6
    %v607 = vsel %vm606, 1, 0
    %608 = vset.pattern.permute.xlu0 0
    %609 = vperm.xlu0 %608, %v607
    %v610 = vpop.permute.xlu0 %609
    %vm611 = vcmp.eq.s32.totalorder %v610, 1
    %v612 = vsel %vm611, %v605, %v517
    %613 = vrot.lane.b32.xlu0 %v38, 32
    %v614 = vpop.permute.xlu0 %613
    %v615 = vsel %vm44, %v614, 0
    %617 = vmatpush.msra.mxu0 0.0
    %618 = vmatpush.msra.mxu0 0.0
    %619 = vmatpush.msra.mxu0 0.0
    %620 = vmatpush.msra.mxu0 0.0
    %621 = vmatpush.msra.mxu0 0.0
    %622 = vmatpush.msra.mxu0 0.0
    %623 = vmatpush.msra.mxu0 0.0
    %624 = vmatpush.msra.mxu0 0.0
    %625 = vmatpush.msra.mxu0 0.0
    %626 = vmatpush.msra.mxu0 0.0
    %627 = vmatpush.msra.mxu0 0.0
    %628 = vmatpush.msra.mxu0 0.0
    %629 = vmatpush.msra.mxu0 0.0
    %630 = vmatpush.msra.mxu0 0.0
    %631 = vmatpush.msra.mxu0 %v32
    %632 = vmatpush.msra.mxu0 %v31
    %633 = vmatmul.f32.gmra.mxu0 %v615
    %v634 = vpop.f32.mrf.mxu0
    %v635 = vadd.f32 %v37, %v634
    %636 = vdwg.mxu0
    %638 = vrot.lane.b32.xlu0 %v605, 32
    %v639 = vpop.permute.xlu0 %638
    %v640 = vsel %vm68, %v639, 0
    %642 = vmatpush.msra.mxu0 0.0
    %643 = vmatpush.msra.mxu0 0.0
    %644 = vmatpush.msra.mxu0 0.0
    %645 = vmatpush.msra.mxu0 0.0
    %646 = vmatpush.msra.mxu0 0.0
    %647 = vmatpush.msra.mxu0 0.0
    %648 = vmatpush.msra.mxu0 0.0
    %649 = vmatpush.msra.mxu0 0.0
    %650 = vmatpush.msra.mxu0 0.0
    %651 = vmatpush.msra.mxu0 0.0
    %652 = vmatpush.msra.mxu0 0.0
    %653 = vmatpush.msra.mxu0 0.0
    %654 = vmatpush.msra.mxu0 %v36
    %655 = vmatpush.msra.mxu0 %v35
    %656 = vmatpush.msra.mxu0 %v34
    %657 = vmatpush.msra.mxu0 %v33
    %658 = vmatmul.f32.gmra.mxu0 %v640
    %v659 = vpop.f32.mrf.mxu0
    %v660 = vadd.f32 0.0, %v659
    %661 = vdwg.mxu0
    %v662 = vadd.f32 %v635, %v660
    %v663 = vxor.u32 %v662, 2147483648
    %v664 = vmul.f32 %v663, 1.442695
    %v665 = vpow.pop %v664
    %v666 = vadd.f32 %v665, 1.0
    %v667 = vrcp.pop %v666
    %v668 = vmul.f32 %v666, %v667
    %v669 = vsub.f32 1.0, %v668
    %v670 = vmul.f32 %v667, %v669
    %v671 = vadd.f32 %v667, %v670
    %vm672 = vweird.f32 %v666
    %vm673 = vweird.f32 %v667
    %vm674 = vmor %vm672, %vm673
    %v675 = vsel %vm674, %v667, %v671
    %v676 = vand.u32 2147483647, %v666
    %vm677 = vcmp.eq.f32.partialorder %v676, 8.507059e+37
    %v678 = vand.u32 %v666, 2147483648
    %v679 = vor.u32 1.1754944e-38, %v678
    %v680 = vsel %vm677, %v679, %v675
    %v681 = vmul.f32 1.0, %v680
    %v682 = vmul.f32 %v681, 2.0
    %v683 = vsub.f32 %v682, 1.0
    %v684 = vmul.f32 %v681, %v599
    %686 = vrot.lane.b32.xlu0 %v683, 64
    %v687 = vpop.permute.xlu0 %686
    %v689 = vmul.f32 %v681, %v687
    %691 = vrot.lane.b32.xlu0 %v689, 32
    %v692 = vpop.permute.xlu0 %691
    %v694 = vadd.f32 %v684, %v692
    %v695 = vtanh.pop %v694
    %697 = vrot.lane.b32.xlu0 %v695, 64
    %v698 = vpop.permute.xlu0 %697
    %v700 = vmul.f32 %v681, %v698
    %vm701 = vcmp.eq.s32.totalorder %v43, 7
    %v702 = vsel %vm701, 1, 0
    %703 = vset.pattern.permute.xlu0 0
    %704 = vperm.xlu0 %703, %v702
    %v705 = vpop.permute.xlu0 %704
    %vm706 = vcmp.eq.s32.totalorder %v705, 1
    %v707 = vsel %vm706, %v700, %v612
    %708 = vrot.lane.b32.xlu0 %v38, 16
    %v709 = vpop.permute.xlu0 %708
    %v710 = vsel %vm44, %v709, 0
    %712 = vmatpush.msra.mxu0 0.0
    %713 = vmatpush.msra.mxu0 0.0
    %714 = vmatpush.msra.mxu0 0.0
    %715 = vmatpush.msra.mxu0 0.0
    %716 = vmatpush.msra.mxu0 0.0
    %717 = vmatpush.msra.mxu0 0.0
    %718 = vmatpush.msra.mxu0 0.0
    %719 = vmatpush.msra.mxu0 0.0
    %720 = vmatpush.msra.mxu0 0.0
    %721 = vmatpush.msra.mxu0 0.0
    %722 = vmatpush.msra.mxu0 0.0
    %723 = vmatpush.msra.mxu0 0.0
    %724 = vmatpush.msra.mxu0 0.0
    %725 = vmatpush.msra.mxu0 0.0
    %726 = vmatpush.msra.mxu0 %v32
    %727 = vmatpush.msra.mxu0 %v31
    %728 = vmatmul.f32.gmra.mxu0 %v710
    %v729 = vpop.f32.mrf.mxu0
    %v730 = vadd.f32 %v37, %v729
    %731 = vdwg.mxu0
    %733 = vrot.lane.b32.xlu0 %v700, 32
    %v734 = vpop.permute.xlu0 %733
    %v735 = vsel %vm68, %v734, 0
    %737 = vmatpush.msra.mxu0 0.0
    %738 = vmatpush.msra.mxu0 0.0
    %739 = vmatpush.msra.mxu0 0.0
    %740 = vmatpush.msra.mxu0 0.0
    %741 = vmatpush.msra.mxu0 0.0
    %742 = vmatpush.msra.mxu0 0.0
    %743 = vmatpush.msra.mxu0 0.0
    %744 = vmatpush.msra.mxu0 0.0
    %745 = vmatpush.msra.mxu0 0.0
    %746 = vmatpush.msra.mxu0 0.0
    %747 = vmatpush.msra.mxu0 0.0
    %748 = vmatpush.msra.mxu0 0.0
    %749 = vmatpush.msra.mxu0 %v36
    %750 = vmatpush.msra.mxu0 %v35
    %751 = vmatpush.msra.mxu0 %v34
    %752 = vmatpush.msra.mxu0 %v33
    %753 = vmatmul.f32.gmra.mxu0 %v735
    %v754 = vpop.f32.mrf.mxu0
    %v755 = vadd.f32 0.0, %v754
    %756 = vdwg.mxu0
    %v757 = vadd.f32 %v730, %v755
    %v758 = vxor.u32 %v757, 2147483648
    %v759 = vmul.f32 %v758, 1.442695
    %v760 = vpow.pop %v759
    %v761 = vadd.f32 %v760, 1.0
    %v762 = vrcp.pop %v761
    %v763 = vmul.f32 %v761, %v762
    %v764 = vsub.f32 1.0, %v763
    %v765 = vmul.f32 %v762, %v764
    %v766 = vadd.f32 %v762, %v765
    %vm767 = vweird.f32 %v761
    %vm768 = vweird.f32 %v762
    %vm769 = vmor %vm767, %vm768
    %v770 = vsel %vm769, %v762, %v766
    %v771 = vand.u32 2147483647, %v761
    %vm772 = vcmp.eq.f32.partialorder %v771, 8.507059e+37
    %v773 = vand.u32 %v761, 2147483648
    %v774 = vor.u32 1.1754944e-38, %v773
    %v775 = vsel %vm772, %v774, %v770
    %v776 = vmul.f32 1.0, %v775
    %v777 = vmul.f32 %v776, 2.0
    %v778 = vsub.f32 %v777, 1.0
    %v779 = vmul.f32 %v776, %v694
    %781 = vrot.lane.b32.xlu0 %v778, 64
    %v782 = vpop.permute.xlu0 %781
    %v784 = vmul.f32 %v776, %v782
    %786 = vrot.lane.b32.xlu0 %v784, 32
    %v787 = vpop.permute.xlu0 %786
    %v789 = vadd.f32 %v779, %v787
    %v790 = vtanh.pop %v789
    %792 = vrot.lane.b32.xlu0 %v790, 64
    %v793 = vpop.permute.xlu0 %792
    %v795 = vmul.f32 %v776, %v793
    %vm796 = vcmp.eq.s32.totalorder %v43, 8
    %v797 = vsel %vm796, 1, 0
    %798 = vset.pattern.permute.xlu0 0
    %799 = vperm.xlu0 %798, %v797
    %v800 = vpop.permute.xlu0 %799
    %vm801 = vcmp.eq.s32.totalorder %v800, 1
    %v802 = vsel %vm801, %v795, %v707
    %v803 = vld [vmem:[#allocation2 + $0x78] sm:$0xf]
    %v804 = vlaneseq
    %v805 = vshrl.u32 %v804, 7
    %v806 = vlaneseq
    %v807 = vand.u32 %v806, 127
    %v808 = vld [vmem:[#allocation2 + $0x38] sm:$0xff]
    %v809 = vld [vmem:[#allocation2 + $0x40] sm:$0xff]
    %v810 = vld [vmem:[#allocation2 + $0x48] sm:$0xff]
    %v811 = vld [vmem:[#allocation2 + $0x50] sm:$0xff]
    %813 = vrot.lane.b32.xlu0 %v802, 32
    %v814 = vpop.permute.xlu0 %813
    %v815 = vsel %vm68, %v814, 0
    %817 = vmatpush.msra.mxu0 0.0
    %818 = vmatpush.msra.mxu0 0.0
    %819 = vmatpush.msra.mxu0 0.0
    %820 = vmatpush.msra.mxu0 0.0
    %821 = vmatpush.msra.mxu0 0.0
    %822 = vmatpush.msra.mxu0 0.0
    %823 = vmatpush.msra.mxu0 0.0
    %824 = vmatpush.msra.mxu0 0.0
    %825 = vmatpush.msra.mxu0 0.0
    %826 = vmatpush.msra.mxu0 0.0
    %827 = vmatpush.msra.mxu0 0.0
    %828 = vmatpush.msra.mxu0 0.0
    %829 = vmatpush.msra.mxu0 %v811
    %830 = vmatpush.msra.mxu0 %v810
    %831 = vmatpush.msra.mxu0 %v809
    %832 = vmatpush.msra.mxu0 %v808
    %833 = vmatmul.f32.gmra.mxu0 %v815
    %v834 = vpop.f32.mrf.mxu0
    %v835 = vadd.f32 0.0, %v834
    %836 = vdwg.mxu0
    %v837 = vmul.u32 %v805, 2
    %vm838 = vcmp.eq.s32.totalorder %v807, %v837
    %v839 = vsel %vm838, 1, 0
    %v840 = vcvt.s32.f32 %v839
    %vm841 = vcmask 64512
    %v843 = vsel %vm841, %v840, 0
    %845 = vmatpush.msra.mxu0 0.0
    %846 = vmatpush.msra.mxu0 0.0
    %847 = vmatpush.msra.mxu0 0.0
    %848 = vmatpush.msra.mxu0 0.0
    %849 = vmatpush.msra.mxu0 0.0
    %850 = vmatpush.msra.mxu0 0.0
    %851 = vmatpush.msra.mxu0 0.0
    %852 = vmatpush.msra.mxu0 0.0
    %853 = vmatpush.msra.mxu0 0.0
    %854 = vmatpush.msra.mxu0 0.0
    %855 = vmatpush.msra.mxu0 0.0
    %856 = vmatpush.msra.mxu0 0.0
    %857 = vmatpush.msra.mxu0 0.0
    %858 = vmatpush.msra.mxu0 0.0
    %859 = vmatpush.msra.mxu0 0.0
    %860 = vmatpush.msra.mxu0 %v835
    %861 = vmatmul.f32.gmra.mxu0 %v843
    %v862 = vpop.f32.mrf.mxu0
    %v863 = vadd.f32 0.0, %v862
    %864 = vdwg.mxu0
    %v865 = vadd.f32 %v803, %v863
    %v866 = vld [vmem:[#allocation2 + $0x58] sm:$0xff]
    %v867 = vld [vmem:[#allocation2 + $0x60] sm:$0xff]
    %v868 = vld [vmem:[#allocation2 + $0x68] sm:$0xff]
    %v869 = vld [vmem:[#allocation2 + $0x70] sm:$0xff]
    %870 = vmatpush.msra.mxu0 0.0
    %871 = vmatpush.msra.mxu0 0.0
    %872 = vmatpush.msra.mxu0 0.0
    %873 = vmatpush.msra.mxu0 0.0
    %874 = vmatpush.msra.mxu0 0.0
    %875 = vmatpush.msra.mxu0 0.0
    %876 = vmatpush.msra.mxu0 0.0
    %877 = vmatpush.msra.mxu0 0.0
    %878 = vmatpush.msra.mxu0 0.0
    %879 = vmatpush.msra.mxu0 0.0
    %880 = vmatpush.msra.mxu0 0.0
    %881 = vmatpush.msra.mxu0 0.0
    %882 = vmatpush.msra.mxu0 %v869
    %883 = vmatpush.msra.mxu0 %v868
    %884 = vmatpush.msra.mxu0 %v867
    %885 = vmatpush.msra.mxu0 %v866
    %886 = vmatmul.f32.gmra.mxu0 %v815
    %v887 = vpop.f32.mrf.mxu0
    %v888 = vadd.f32 0.0, %v887
    %889 = vdwg.mxu0
    %v890 = vadd.s32 %v837, 1
    %vm891 = vcmp.eq.s32.totalorder %v807, %v890
    %v892 = vsel %vm891, 1, 0
    %v893 = vcvt.s32.f32 %v892
    %v895 = vsel %vm841, %v893, 0
    %897 = vmatpush.msra.mxu0 0.0
    %898 = vmatpush.msra.mxu0 0.0
    %899 = vmatpush.msra.mxu0 0.0
    %900 = vmatpush.msra.mxu0 0.0
    %901 = vmatpush.msra.mxu0 0.0
    %902 = vmatpush.msra.mxu0 0.0
    %903 = vmatpush.msra.mxu0 0.0
    %904 = vmatpush.msra.mxu0 0.0
    %905 = vmatpush.msra.mxu0 0.0
    %906 = vmatpush.msra.mxu0 0.0
    %907 = vmatpush.msra.mxu0 0.0
    %908 = vmatpush.msra.mxu0 0.0
    %909 = vmatpush.msra.mxu0 0.0
    %910 = vmatpush.msra.mxu0 0.0
    %911 = vmatpush.msra.mxu0 0.0
    %912 = vmatpush.msra.mxu0 %v888
    %913 = vmatmul.f32.gmra.mxu0 %v895
    %v914 = vpop.f32.mrf.mxu0
    %v915 = vadd.f32 0.0, %v914
    %916 = vdwg.mxu0
    %v917 = vadd.f32 %v865, %v915
    %vm918 = vcmask 35840
    %919 = vst.msk [vmem:[#allocation5] sm:$0xf] %vm918, %v917
    // Predicated region
    $region18: #{probe_forward.1} parent=1 // pred_check
      _
    $region19: #{probe_forward.1} parent=1 // pred_check_branch
      %921 = sbr.rel (0) target = $region21
    $region20: #{probe_forward.1} parent=1 // pred_region
      %923 = vsyncadd [#allocation4], 0
      %s925 = sshll.u32 [#allocation5], 4
      %s926 = int_to_ptr.vmem [resolvable:$true] %s925
      %s927 = sshll.u32 %s3, 4
      %s928 = int_to_ptr.hbm [resolvable:$true] %s927
      %930 = dma.vmem_to_hbm [thread:$0]  %s926, 64, %s928, [#allocation4]
    $region21: #{probe_forward.1} parent=1 // pred_fallthru
      _
    // Predicated region
    $region22: #{probe_forward.1} parent=1 // pred_check
      _
    $region23: #{probe_forward.1} parent=1 // pred_check_branch
      %932 = sbr.rel (0) target = $region25
    $region24: #{probe_forward.1} parent=1 // pred_region
      %934 = dma.done [#allocation4], 64
    $region25: #{probe_forward.1} parent=1 // pred_fallthru
      _
    %935 = vsyncpa [#allocation3], 1
    %936 = vsyncpa [#allocation4], 1

</llo_original>
